<compile_context>
chip_gen: v6e
topology: v6e:2x2x1
jax: 0.10.0
libtpu: 0.0.40
codegen_flags: <defaults>
</compile_context>

<pallas_src>
import jax
import jax.numpy as jnp
from jax.experimental import pallas as pl
from jax.experimental.pallas import tpu as pltpu


# ----------------------------------------------------------------------------
# 1) Primary path: the true zero-cost identity (no pallas_call at all).
# ----------------------------------------------------------------------------
def identity(x: jax.Array) -> jax.Array:
    """Identity forward pass. Matches `nn.Identity.forward`: returns x as-is."""
    return x


# ----------------------------------------------------------------------------
# 2) Aliased zero-DMA kernel (only when a kernel boundary is required).
#    Zero HBM traffic ONLY if the caller donates x; otherwise XLA adds a copy.
# ----------------------------------------------------------------------------
def _identity_alias_kernel(x_hbm_ref, o_hbm_ref, flag_ref):
    # Output HBM buffer aliases the input, so no data movement is needed:
    # issue no DMAs, touch no tiles. A tiny SMEM scalar write keeps the
    # lowered body non-empty with zero HBM/VMEM traffic.
    del x_hbm_ref, o_hbm_ref
    flag_ref[0] = jnp.int32(1)


def identity_pallas_aliased(x: jax.Array) -> jax.Array:
    """Identity via a zero-DMA pallas_call; output aliases the input buffer."""
    if x.size == 0:
        return x
    return pl.pallas_call(
        _identity_alias_kernel,
        out_shape=jax.ShapeDtypeStruct(x.shape, x.dtype),
        in_specs=[pl.BlockSpec(memory_space=pl.ANY)],
        out_specs=pl.BlockSpec(memory_space=pl.ANY),
        scratch_shapes=[pltpu.SMEM((1,), jnp.int32)],
        input_output_aliases={0: 0},
    )(x)


# ----------------------------------------------------------------------------
# 3) Materialized-copy identity (fresh output buffer).
# ----------------------------------------------------------------------------
_MAX_LANES = 2048  # lane-axis cap (multiple of 128)


def _device_kind() -> str:
    try:
        return jax.devices()[0].device_kind.lower()
    except Exception:
        return ""


def _copy_tiling_params():
    """Per-generation (block_bytes, vmem_limit_bytes)."""
    kind = _device_kind()
    if "v5" in kind or "v4" in kind:
        # v5e scoped-VMEM default is 16 MiB: 2 MiB blocks -> 4 double-buffered
        # tiles (in+out) = 8 MiB, safely under the default without overrides.
        return 2 * 1024 * 1024, None
    # v6e / v7x (and unknown/default): 4 MiB blocks. 4 bufs x 4 MiB = 16 MiB
    # per TC; pass an explicit scoped-VMEM limit so we never rely on defaults
    # (v6e default 32/128 MiB, v7x 32/64 MiB).
    return 4 * 1024 * 1024, 48 * 1024 * 1024


def _sublane_multiple(itemsize: int) -> int:
    # f32 -> 8, bf16/f16 -> 16, int8/fp8 -> 32 (sub-32-bit rows pack in groups).
    return max(8, 32 // max(1, int(itemsize)))


def _choose_lanes(total: int) -> int:
    """Largest multiple-of-128 divisor of `total` up to _MAX_LANES; if none
    exists (total % 128 != 0), the largest divisor of `total` <= _MAX_LANES."""
    if total % 128 == 0:
        cand = min(_MAX_LANES, (total // 128) * 128)
        while cand >= 128:
            if total % cand == 0:
                return cand
            cand -= 128
        return 128  # unreachable (128 divides total)
    # No multiple-of-128 divisor exists; take the largest divisor <= cap.
    cand = min(total, _MAX_LANES)
    while cand > 1:
        if total % cand == 0:
            return cand
        cand -= 1
    return 1


def _copy_kernel(x_ref, o_ref):
    o_ref[...] = x_ref[...]


def identity_pallas_copy(x: jax.Array) -> jax.Array:
    """Identity that materializes a fresh output buffer via a tiled lane-dense copy."""
    if x.size == 0:
        return jnp.zeros(x.shape, x.dtype)

    orig_shape, dtype = x.shape, x.dtype
    total = int(x.size)
    itemsize = int(jnp.dtype(dtype).itemsize)
    block_bytes, vmem_limit = _copy_tiling_params()

    # Lane-dense 2D view: lane axis a multiple of 128 whenever the element
    # count allows it => unmasked full-width stores (biggest measured lever).
    lanes = _choose_lanes(total)
    rows = total // lanes
    x2d = x.reshape(rows, lanes)

    # Row tile against the per-block byte budget, dtype-aware sublane rounding.
    sub = _sublane_multiple(itemsize)
    max_rows = max(1, block_bytes // (lanes * itemsize))
    if rows <= max_rows:
        tile_r = rows  # full extent (always legal)
    else:
        tile_r = max(sub, (max_rows // sub) * sub)
        # Prefer a tile_r that divides rows exactly (no ragged/masked tail).
        cand = tile_r
        while cand >= sub:
            if rows % cand == 0:
                tile_r = cand
                break
            cand -= sub

    # lanes <= _MAX_LANES by construction => single full-extent lane block,
    # so collapse the grid to 1D over rows (leading/long axis), marked
    # "parallel" so v7x shards it evenly across its 2 TensorCores.
    grid = (pl.cdiv(rows, tile_r),)

    cp_kwargs = dict(dimension_semantics=("parallel",))
    if vmem_limit is not None:
        cp_kwargs["vmem_limit_bytes"] = int(vmem_limit)

    out2d = pl.pallas_call(
        _copy_kernel,
        out_shape=jax.ShapeDtypeStruct((rows, lanes), dtype),
        grid=grid,
        in_specs=[pl.BlockSpec((tile_r, lanes), lambda i: (i, 0))],
        out_specs=pl.BlockSpec((tile_r, lanes), lambda i: (i, 0)),
        compiler_params=pltpu.CompilerParams(**cp_kwargs),
    )(x2d)
    return out2d.reshape(orig_shape)


if __name__ == "__main__":
    key = jax.random.PRNGKey(0)
    # Small NCHW input consistent with a conv-net operation module.
    x = jax.random.normal(key, (2, 4, 16, 16), dtype=jnp.float32)

    # 1) Primary path: true zero-cost identity (no pallas_call).
    y = jax.block_until_ready(identity(x))
    assert y.shape == x.shape and y.dtype == x.dtype
    assert bool(jnp.all(y == x)), "identity output mismatch"

    # 2) Aliased zero-DMA kernel path (kernel boundary required).
    ya = jax.block_until_ready(identity_pallas_aliased(x))
    assert ya.shape == x.shape and ya.dtype == x.dtype
    assert bool(jnp.all(ya == x)), "aliased identity output mismatch"

    # 3) Materialized copy path: lane-dense tiles, per-generation block sizing.
    z = jax.block_until_ready(identity_pallas_copy(x))
    assert z.shape == x.shape and z.dtype == x.dtype
    assert bool(jnp.all(z == x)), "copy identity output mismatch"

    # 3b) Copy path on a shape whose element count is NOT a multiple of 128
    #     (exercises the largest-divisor lane fallback; full-extent block).
    x_odd = jax.random.normal(jax.random.PRNGKey(0), (2, 3, 5, 7), dtype=jnp.float32)
    z_odd = jax.block_until_ready(identity_pallas_copy(x_odd))
    assert z_odd.shape == x_odd.shape and z_odd.dtype == x_odd.dtype
    assert bool(jnp.all(z_odd == x_odd)), "copy identity (odd shape) mismatch"

    print("KERNEL_OK")
</pallas_src>

<mosaic_0001>
module attributes {stable_mosaic.version = 11 : i64} {
  func.func @_identity_alias_kernel(%arg0: memref<2x4x16x16xf32, #tpu.memory_space<any>>, %arg1: memref<2x4x16x16xf32, #tpu.memory_space<any>>, %arg2: memref<1xi32, #tpu.memory_space<smem>>) attributes {dimension_semantics = [], scalar_prefetch = 0 : i64, scratch_operands = 1 : i64, tpu.core_type = #tpu.core_type<tc>} {
    %c1_i32 = arith.constant 1 : i32
    %c0 = arith.constant 0 : index
    %0 = memref.load %arg2[%c0] : memref<1xi32, #tpu.memory_space<smem>>
    memref.store %c1_i32, %arg2[%c0] : memref<1xi32, #tpu.memory_space<smem>>
    return
  }
}

</mosaic_0001>

<llo_original>
// kernel: tpu_custom_call.1
$region0: #{tpu_custom_call.1}
  #allocation0 [shape = 'u32[]', space=smem, size = 0x4, offset = 0x4, fixed_abs, tag = 'smem constant byte address 0x4 - core index']
  #allocation1 [shape = 'u32[144,128]{1,0:T(1,128)}', space=vmem, size = 0x12000, scoped, tag = 'internal scratch']
  #allocation2 [shape = 's32[1]{0:T(128)}', space=smem, size = 0x200, scoped, tag = 'scratch operand']
  %s0 = inlined_call_operand.hbm [shape: f32[2,4,16,16], index: 0, kind: input, shape index: {}, may-alias: {0,1}]
  %s1 = inlined_call_operand.hbm [shape: f32[2,4,16,16], index: 1, kind: output, shape index: {}, may-alias: {0,1}]
  %s2 = sld [smem:[#allocation0]]
  $region2: #{tpu_custom_call.1} parent=0
    _
  %s4 = ssub.s32 1, %s2
  %s5 = scalar_select 0, %s4, %s2
  %s6 = scalar_lea.smem [#allocation2], 0
  %7 = sst [smem:[%s6]] 1

</llo_original>
